<compile_context>
chip_gen: v6e
topology: v6e:2x2x1
jax: 0.10.0
libtpu: 0.0.40
codegen_flags: <defaults>
</compile_context>

<pallas_src>
import jax
import jax.numpy as jnp
from jax.experimental import pallas as pl
from jax.experimental.pallas import tpu as pltpu


def _normalization_kernel(x_ref, ms_ref, o_ref):
    # x_ref / o_ref : (br, bc) tiles of the flattened (N*C, H*W) image.
    # ms_ref        : (br, 2) float32, per-row [mean, 1/std].
    m = ms_ref[:, 0:1]                      # (br, 1) broadcast over lanes
    s = ms_ref[:, 1:2]
    x = x_ref[...].astype(jnp.float32)      # compute in f32, cast at the store
    o_ref[...] = ((x - m) * s).astype(o_ref.dtype)


def _round_down(v, m):
    return (v // m) * m


def _round_up(v, m):
    return -(-v // m) * m


def normalization(x, mean, std, *,
                  max_block_bytes=4 * 1024 * 1024,
                  min_split_bytes=2 * 1024 * 1024,
                  small_fallback_bytes=128 * 1024):
    """(x - mean[:, None, None]) / std[:, None, None] for NCHW input x."""
    N, C, H, W = x.shape
    R, L = N * C, H * W
    itemsize = jnp.dtype(x.dtype).itemsize
    total_bytes = R * L * itemsize

    mean = jnp.asarray(mean, jnp.float32)
    std = jnp.asarray(std, jnp.float32)

    # Tiny inputs: launch overhead > data movement -> plain fused XLA op.
    if total_bytes < small_fallback_bytes:
        return ((x.astype(jnp.float32) - mean[None, :, None, None])
                / std[None, :, None, None]).astype(x.dtype)

    # Lane-dense 2-D view: row = n*C + c, lanes = H*W (free row-major reshape).
    x2 = x.reshape(R, L)

    # Per-row [mean, 1/std] fused into a single tiny f32 side input.
    # TODO(synk): std == 0 gives inf, matching PyTorch's divide-by-zero.
    mean_rows = jnp.tile(mean, N)                       # (R,)
    inv_std_rows = jnp.tile(1.0 / std, N)               # (R,)
    ms = jnp.stack([mean_rows, inv_std_rows], axis=1)   # (R, 2) float32

    # dtype-aware sublane multiple: f32 -> 8, bf16 -> 16, int8/fp8 -> 32.
    sub = max(8, 32 // itemsize)
    max_elems = max(sub * 128, max_block_bytes // itemsize)

    # Row block: keep all rows when R is small (the common N*C case);
    # otherwise the largest sublane multiple that still leaves >=128 lanes
    # inside the byte budget.  No even-division requirement: pl.cdiv +
    # partial edge blocks keep the VMEM footprint bounded.
    row_cap = max(sub, max_elems // 128)
    if R <= row_cap:
        br = R
    else:
        br = max(sub, _round_down(row_cap, sub))

    # Column block: fill the remaining byte budget with 128-lane multiples.
    col_budget = max(128, max_elems // br)
    if L <= col_budget:
        bc = L
    else:
        bc = max(128, _round_down(col_budget, 128))

    # v7x has 2 TensorCores: a non-trivial problem should expose >=2 grid
    # steps along a "parallel" axis (no effect on single-core v5e/v6e).
    if pl.cdiv(R, br) * pl.cdiv(L, bc) == 1 and total_bytes >= min_split_bytes:
        if L >= 256:
            bc = _round_up(pl.cdiv(L, 2), 128)
        elif R >= 2 * sub:
            br = _round_up(pl.cdiv(R, 2), sub)

    grid = (pl.cdiv(R, br), pl.cdiv(L, bc))

    cost = pl.CostEstimate(
        flops=2 * R * L,                                     # sub + mul / elem
        transcendentals=0,
        bytes_accessed=2 * R * L * itemsize + R * 2 * 4,
    )

    out2 = pl.pallas_call(
        _normalization_kernel,
        out_shape=jax.ShapeDtypeStruct((R, L), x.dtype),
        grid_spec=pl.GridSpec(
            grid=grid,
            in_specs=[
                pl.BlockSpec((br, bc), lambda i, j: (i, j)),
                pl.BlockSpec((br, 2), lambda i, j: (i, 0)),
            ],
            out_specs=pl.BlockSpec((br, bc), lambda i, j: (i, j)),
        ),
        compiler_params=pltpu.CompilerParams(
            dimension_semantics=("parallel", "parallel"),
            # ~4x block double-buffered footprint (<~16 MiB + margin); safe on
            # v5e/v6e (128 MiB physical) and within v7x's 64 MiB.
            vmem_limit_bytes=32 * 1024 * 1024,
        ),
        cost_estimate=cost,
    )(x2, ms)

    return out2.reshape(N, C, H, W)


if __name__ == "__main__":
    key0, key1, key2 = jax.random.split(jax.random.PRNGKey(0), 3)

    # "ImageNet-like" per-channel constants (the module's __init__ args).
    mean = jnp.array([0.485, 0.456, 0.406], dtype=jnp.float32)
    std = jnp.array([0.229, 0.224, 0.225], dtype=jnp.float32)

    def ref_fn(x):
        # Plain-JAX reference matching PyTorch broadcasting semantics.
        return ((x.astype(jnp.float32) - mean[None, :, None, None])
                / std[None, :, None, None]).astype(x.dtype)

    # 1) Small RGB batch (the typical style-transfer input): exercises both the
    #    tiny-input XLA fallback and (forced) the Pallas path at this size.
    x_small = jax.random.normal(key0, (2, 3, 16, 16), dtype=jnp.float32)
    out_fb = jax.block_until_ready(normalization(x_small, mean, std))
    out_pl = jax.block_until_ready(
        normalization(x_small, mean, std, small_fallback_bytes=0))
    assert jnp.allclose(out_fb, ref_fn(x_small), rtol=1e-5, atol=1e-6), "small fallback mismatch"
    assert jnp.allclose(out_pl, ref_fn(x_small), rtol=1e-5, atol=1e-6), "small pallas mismatch"

    # 2) Larger f32 image: lane-dense single-block Pallas path.
    x_big = jax.random.normal(key1, (4, 3, 128, 128), dtype=jnp.float32)
    out_big = jax.block_until_ready(normalization(x_big, mean, std))
    assert jnp.allclose(out_big, ref_fn(x_big), rtol=1e-5, atol=1e-6), "large mismatch"

    # 3) bf16 input big enough to trigger the 2-step (v7x-friendly) grid and
    #    the f32-compute / bf16-store path.
    x_bf16 = jax.random.normal(key2, (8, 3, 256, 256), dtype=jnp.bfloat16)
    out_bf16 = jax.block_until_ready(normalization(x_bf16, mean, std))
    assert jnp.allclose(out_bf16.astype(jnp.float32),
                        ref_fn(x_bf16).astype(jnp.float32),
                        rtol=2e-2, atol=2e-2), "bf16 mismatch"

    print("KERNEL_OK")
</pallas_src>

<mosaic_0001>
module attributes {stable_mosaic.version = 11 : i64} {
  func.func @_normalization_kernel(%arg0: i32, %arg1: i32, %arg2: memref<6x256xf32, #tpu.memory_space<vmem>>, %arg3: memref<6x2xf32, #tpu.memory_space<vmem>>, %arg4: memref<6x256xf32, #tpu.memory_space<vmem>>) attributes {dimension_semantics = [#tpu.dimension_semantics<parallel>, #tpu.dimension_semantics<parallel>], iteration_bounds = array<i64: 1, 1>, scalar_prefetch = 0 : i64, scratch_operands = 0 : i64, tpu.core_type = #tpu.core_type<tc>, window_params = [{transform_indices = @transform_0, window_bounds = array<i64: 6, 256>}, {transform_indices = @transform_1, window_bounds = array<i64: 6, 2>}, {transform_indices = @transform_2, window_bounds = array<i64: 6, 256>}]} {
    %c0 = arith.constant 0 : index
    %c0_0 = arith.constant 0 : index
    %0 = vector.load %arg3[%c0, %c0_0] : memref<6x2xf32, #tpu.memory_space<vmem>>, vector<6x1xf32>
    %c0_1 = arith.constant 0 : index
    %c1 = arith.constant 1 : index
    %1 = vector.load %arg3[%c0_1, %c1] : memref<6x2xf32, #tpu.memory_space<vmem>>, vector<6x1xf32>
    %c0_2 = arith.constant 0 : index
    %c0_3 = arith.constant 0 : index
    %2 = vector.load %arg2[%c0_2, %c0_3] : memref<6x256xf32, #tpu.memory_space<vmem>>, vector<6x256xf32>
    %3 = vector.broadcast %0 : vector<6x1xf32> to vector<6x256xf32>
    %4 = arith.subf %2, %3 : vector<6x256xf32>
    %5 = vector.broadcast %1 : vector<6x1xf32> to vector<6x256xf32>
    %6 = arith.mulf %4, %5 : vector<6x256xf32>
    %c0_4 = arith.constant 0 : index
    %c0_5 = arith.constant 0 : index
    %7 = vector.load %arg4[%c0_4, %c0_5] : memref<6x256xf32, #tpu.memory_space<vmem>>, vector<6x256xf32>
    tpu.vector_store %arg4[%c0_4, %c0_5], %6 {strides = array<i32>} : memref<6x256xf32, #tpu.memory_space<vmem>>, vector<6x256xf32>,
    return
  }
  func.func @transform_0(%arg0: i32, %arg1: i32) -> (i32, i32) {
    %c0_i32 = arith.constant 0 : i32
    return %arg0, %arg1 : i32, i32
  }
  func.func @transform_1(%arg0: i32, %arg1: i32) -> (i32, i32) {
    %c0_i32 = arith.constant 0 : i32
    %c0_i32_0 = arith.constant 0 : i32
    return %arg0, %c0_i32 : i32, i32
  }
  func.func @transform_2(%arg0: i32, %arg1: i32) -> (i32, i32) {
    %c0_i32 = arith.constant 0 : i32
    return %arg0, %arg1 : i32, i32
  }
}

</mosaic_0001>

<llo_original>
// kernel: tpu_custom_call.1
$region0: #{tpu_custom_call.1}
  #allocation0 [shape = 'u32[]', space=smem, size = 0x4, offset = 0x4, fixed_abs, tag = 'smem constant byte address 0x4 - core index']
  #allocation1 [shape = 'u32[144,128]{1,0:T(1,128)}', space=vmem, size = 0x12000, scoped, tag = 'internal scratch']
  %s0 = inlined_call_operand.hbm [shape: f32[6,256], index: 0, kind: input, shape index: {}]
  %s1 = inlined_call_operand.vmem [shape: f32[6,2], index: 1, kind: input, shape index: {}]
  %s2 = inlined_call_operand.hbm [shape: f32[6,256], index: 2, kind: output, shape index: {}]
  %s3 = sld [smem:[#allocation0]]
  $region22: #{tpu_custom_call.1} parent=0
    _
  %s5 = ssub.s32 1, %s3
  %s6 = scalar_select 0, %s5, %s3
  $region1: #{tpu_custom_call.1} parent=0
    #allocation2 [shape = 'u8[8192]{0}', space=vmem, size = 0x2000, scoped, tag = 'input window, operand 0, single buffered']
    #allocation3 [shape = 's32[1]{0}', space=sflag, size = 0x4, scoped, tag = 'scoped memory for tpu_custom_call.1']
    #allocation4 [shape = 's32[1]{0}', space=sflag, size = 0x4, scoped, tag = 'scoped memory for tpu_custom_call.1']
    #allocation5 [shape = 'u8[8192]{0}', space=vmem, size = 0x2000, scoped, tag = 'output window, operand 0, single buffered']
    %7 = vsyncpa [#allocation3], 0
    %8 = vsyncpa [#allocation4], 0
    // Predicated region
    $region2: #{tpu_custom_call.1} parent=1 // pred_check
      _
    $region3: #{tpu_custom_call.1} parent=1 // pred_check_branch
      %10 = sbr.rel (0) target = $region5
    $region4: #{tpu_custom_call.1} parent=1 // pred_region
      %s12 = ssub.s32 256, 256
      %13 = vsyncadd [#allocation3], %s12
      %s15 = sshll.u32 [#allocation2], 4
      %s16 = int_to_ptr.vmem [resolvable:$true] %s15
      %18 = dma.hbm_to_vmem [thread:$0]  %s0, 256, %s16, [#allocation3]
    $region5: #{tpu_custom_call.1} parent=1 // pred_fallthru
      _
    // Predicated region
    $region6: #{tpu_custom_call.1} parent=1 // pred_check
      _
    $region7: #{tpu_custom_call.1} parent=1 // pred_check_branch
      %20 = sbr.rel (0) target = $region9
    $region8: #{tpu_custom_call.1} parent=1 // pred_region
      _
    $region9: #{tpu_custom_call.1} parent=1 // pred_fallthru
      _
    // Predicated region
    $region10: #{tpu_custom_call.1} parent=1 // pred_check
      _
    $region11: #{tpu_custom_call.1} parent=1 // pred_check_branch
      %22 = sbr.rel (0) target = $region13
    $region12: #{tpu_custom_call.1} parent=1 // pred_region
      %23 = dma.done [#allocation3], 256
    $region13: #{tpu_custom_call.1} parent=1 // pred_fallthru
      _
    %v24 = vld [vmem:[%s1] sm:$0x3f]
    %v25 = vld [vmem:[#allocation2] sm:$0x3f]
    %v26 = vld [vmem:[#allocation2 + $0x8] sm:$0x3f]
    %28 = vset.pattern.permute.xlu0 0
    %29 = vperm.xlu0 %28, %v24
    %v30 = vpop.permute.xlu0 %29
    %v32 = vsub.f32 %v25, %v30
    %v33 = vsub.f32 %v26, %v30
    %34 = vset.pattern.permute.xlu0 1
    %35 = vperm.xlu0 %34, %v24
    %v36 = vpop.permute.xlu0 %35
    %v38 = vmul.f32 %v32, %v36
    %v39 = vmul.f32 %v33, %v36
    %40 = vst [vmem:[#allocation5] sm:$0x3f] %v38
    %41 = vst [vmem:[#allocation5 + $0x8] sm:$0x3f] %v39
    // Predicated region
    $region14: #{tpu_custom_call.1} parent=1 // pred_check
      _
    $region15: #{tpu_custom_call.1} parent=1 // pred_check_branch
      %43 = sbr.rel (0) target = $region17
    $region16: #{tpu_custom_call.1} parent=1 // pred_region
      %s45 = ssub.s32 256, 256
      %46 = vsyncadd [#allocation4], %s45
      %s48 = sshll.u32 [#allocation5], 4
      %s49 = int_to_ptr.vmem [resolvable:$true] %s48
      %51 = dma.vmem_to_hbm [thread:$0]  %s49, 256, %s2, [#allocation4]
    $region17: #{tpu_custom_call.1} parent=1 // pred_fallthru
      _
    // Predicated region
    $region18: #{tpu_custom_call.1} parent=1 // pred_check
      _
    $region19: #{tpu_custom_call.1} parent=1 // pred_check_branch
      %53 = sbr.rel (0) target = $region21
    $region20: #{tpu_custom_call.1} parent=1 // pred_region
      %54 = dma.done [#allocation4], 256
    $region21: #{tpu_custom_call.1} parent=1 // pred_fallthru
      _
    %55 = vsyncpa [#allocation3], 1
    %56 = vsyncpa [#allocation4], 1

</llo_original>
